<compile_context>
chip_gen: v7x
topology: tpu7x:2x2x1
jax: 0.10.0
libtpu: 0.0.40
codegen_flags: <defaults>
</compile_context>

<pallas_src>
import jax
import jax.numpy as jnp
from jax.experimental import pallas as pl
from jax.experimental.pallas import tpu as pltpu


def _round_up(x, m):
    return ((x + m - 1) // m) * m


def mlp_kernel(x_ref, w1_ref, b1_ref, w2_ref, b2_ref, o_ref):
    # x arrives as f32 (no wrapper pad/cast pass); cast to bf16 on the VPU
    # right before the MXU.  BN is already folded into W1/b1.
    x = x_ref[...].astype(jnp.bfloat16)
    # ---- Linear(400 -> 200) + folded BN (bf16 MXU, f32 accumulate) ----
    h = jnp.dot(x, w1_ref[...], preferred_element_type=jnp.float32)
    # ---- bias + ReLU (f32 epilogue); Dropout(0.2) identity in eval mode ----
    h = jnp.maximum(h + b1_ref[...], 0.0)
    # ---- Linear(200 -> 10) ----
    y = jnp.dot(h.astype(jnp.bfloat16), w2_ref[...],
                preferred_element_type=jnp.float32)
    y = y + b2_ref[...]
    # ---- Sigmoid: exp on the EUP, divide as approx EUP reciprocal ----
    o_ref[...] = pl.reciprocal(1.0 + jnp.exp(-y), approx=True).astype(o_ref.dtype)


def prepare_params(params, eps=1e-5):
    """One-time weight prep (eval mode): fold BN into W1/b1, pad feature dims
    to lane multiples, cast weights to bf16.  Run once, reuse across calls."""
    scale = params["bn_gamma"] / jnp.sqrt(params["bn_var"] + eps)
    shift = params["bn_beta"] - params["bn_mean"] * scale
    w1f = params["w1"] * scale[None, :]
    b1f = params["b1"] * scale + shift

    d_in, h = params["w1"].shape
    d_out = params["w2"].shape[1]
    h_p = _round_up(h, 128)        # 200 -> 256 : matches v6e/v7x MXU N dim
    d_out_p = _round_up(d_out, 128)  # 10 -> 128 : lane-dense output stores

    w1_p = (jnp.zeros((d_in, h_p), jnp.float32)
            .at[:, :h].set(w1f).astype(jnp.bfloat16))
    b1_p = jnp.zeros((1, h_p), jnp.float32).at[0, :h].set(b1f)
    w2_p = (jnp.zeros((h_p, d_out_p), jnp.float32)
            .at[:h, :d_out].set(params["w2"]).astype(jnp.bfloat16))
    b2_p = jnp.zeros((1, d_out_p), jnp.float32).at[0, :d_out].set(params["b2"])

    return {"w1": w1_p, "b1": b1_p, "w2": w2_p, "b2": b2_p,
            "d_in": d_in, "d_out": d_out}


def mlp_forward(x, prepared, *, tb=512, out_dtype=jnp.float32):
    B, d_in = x.shape
    assert d_in == prepared["d_in"]
    d_out = prepared["d_out"]
    h_p = prepared["w1"].shape[1]
    d_out_p = prepared["w2"].shape[1]

    # Batch tile: large enough to amortize per-step overhead and fill the
    # 256-row MXU on v6e/v7x, bounded by the batch size.  Sweep 256/512/1024.
    TB = min(tb, _round_up(B, 8))
    B_p = _round_up(B, TB)
    if B_p != B:
        # Only the batch rows are padded (feature dim stays at 400).
        x = jnp.zeros((B_p, d_in), x.dtype).at[:B].set(x)

    grid = (B_p // TB,)

    out = pl.pallas_call(
        mlp_kernel,
        out_shape=jax.ShapeDtypeStruct((B_p, d_out_p), out_dtype),
        grid=grid,
        in_specs=[
            # x: unpadded f32, feature dim 400 == full array dim (legal);
            # cast to bf16 in-kernel.
            pl.BlockSpec((TB, d_in), lambda i: (i, 0)),
            pl.BlockSpec((d_in, h_p), lambda i: (0, 0)),     # W1 (resident, bf16)
            pl.BlockSpec((1, h_p), lambda i: (0, 0)),         # b1 (resident, f32)
            pl.BlockSpec((h_p, d_out_p), lambda i: (0, 0)),   # W2 (resident, bf16)
            pl.BlockSpec((1, d_out_p), lambda i: (0, 0)),     # b2 (resident, f32)
        ],
        out_specs=pl.BlockSpec((TB, d_out_p), lambda i: (i, 0)),
        compiler_params=pltpu.CompilerParams(
            dimension_semantics=("parallel",),
            # Explicit so a TB sweep (up to ~2048) isn't silently constrained
            # by v5e's 16 MiB default scoped-VMEM limit; well within v7x's
            # 64 MiB physical VMEM.
            vmem_limit_bytes=32 * 1024 * 1024,
        ),
    )(x, prepared["w1"], prepared["b1"], prepared["w2"], prepared["b2"])

    # Padded batch rows / output columns hold sigmoid(0)=0.5 garbage — they are
    # sliced away here; never read the padded region.
    return out[:B, :d_out]


def init_params(key, d_in=400, hidden=200, d_out=10):
    k1, k2, k3, k4, k5, k6 = jax.random.split(key, 6)
    # PyTorch nn.Linear default init: U(-1/sqrt(fan_in), 1/sqrt(fan_in)).
    lim1 = 1.0 / jnp.sqrt(jnp.float32(d_in))
    lim2 = 1.0 / jnp.sqrt(jnp.float32(hidden))
    return {
        "w1": jax.random.uniform(k1, (d_in, hidden), jnp.float32, -lim1, lim1),
        "b1": jax.random.uniform(k2, (hidden,), jnp.float32, -lim1, lim1),
        "bn_gamma": jnp.ones((hidden,), jnp.float32),
        "bn_beta": jnp.zeros((hidden,), jnp.float32),
        # deterministic non-trivial "running" stats
        "bn_mean": 0.01 * jax.random.normal(k3, (hidden,), jnp.float32),
        "bn_var": jnp.abs(1.0 + 0.1 * jax.random.normal(k4, (hidden,), jnp.float32)),
        "w2": jax.random.uniform(k5, (hidden, d_out), jnp.float32, -lim2, lim2),
        "b2": jax.random.uniform(k6, (d_out,), jnp.float32, -lim2, lim2),
    }


def mlp_reference(x, params):
    eps = 1e-5
    h = x @ params["w1"] + params["b1"]
    h = (h - params["bn_mean"]) / jnp.sqrt(params["bn_var"] + eps)
    h = h * params["bn_gamma"] + params["bn_beta"]
    h = jnp.maximum(h, 0.0)
    y = h @ params["w2"] + params["b2"]
    return jax.nn.sigmoid(y)


if __name__ == "__main__":
    key = jax.random.PRNGKey(0)
    kx, kp = jax.random.split(key)

    B, D_in = 8, 400
    x = jax.random.normal(kx, (B, D_in), jnp.float32)
    params = init_params(kp, d_in=D_in, hidden=200, d_out=10)

    prepared = prepare_params(params)           # one-time weight prep
    out = mlp_forward(x, prepared)
    out = jax.block_until_ready(out)

    ref = mlp_reference(x, params)
    assert out.shape == (B, 10)
    # bf16 MXU inputs + folded BN in bf16 W1 + approx EUP reciprocal ->
    # relaxed tolerance vs the f32 reference.
    max_err = float(jnp.max(jnp.abs(out - ref)))
    assert max_err < 2e-2, max_err
    print("KERNEL_OK")
</pallas_src>

<mosaic_0001>
module attributes {stable_mosaic.version = 11 : i64} {
  func.func @mlp_kernel(%arg0: i32, %arg1: memref<8x400xf32, #tpu.memory_space<vmem>>, %arg2: memref<400x256xbf16, #tpu.memory_space<vmem>>, %arg3: memref<1x256xf32, #tpu.memory_space<vmem>>, %arg4: memref<256x128xbf16, #tpu.memory_space<vmem>>, %arg5: memref<1x128xf32, #tpu.memory_space<vmem>>, %arg6: memref<8x128xf32, #tpu.memory_space<vmem>>) attributes {dimension_semantics = [#tpu.dimension_semantics<parallel>], iteration_bounds = array<i64: 1>, scalar_prefetch = 0 : i64, scratch_operands = 0 : i64, tpu.core_type = #tpu.core_type<tc>, window_params = [{transform_indices = @transform_0, window_bounds = array<i64: 8, 400>}, {pipeline_mode = #tpu.pipeline_mode<synchronous>, transform_indices = @transform_1, window_bounds = array<i64: 400, 256>}, {pipeline_mode = #tpu.pipeline_mode<synchronous>, transform_indices = @transform_2, window_bounds = array<i64: 1, 256>}, {pipeline_mode = #tpu.pipeline_mode<synchronous>, transform_indices = @transform_3, window_bounds = array<i64: 256, 128>}, {pipeline_mode = #tpu.pipeline_mode<synchronous>, transform_indices = @transform_4, window_bounds = array<i64: 1, 128>}, {transform_indices = @transform_5, window_bounds = array<i64: 8, 128>}]} {
    %c0 = arith.constant 0 : index
    %c0_0 = arith.constant 0 : index
    %0 = vector.load %arg1[%c0, %c0_0] : memref<8x400xf32, #tpu.memory_space<vmem>>, vector<8x400xf32>
    %1 = arith.truncf %0 : vector<8x400xf32> to vector<8x400xbf16>
    %c0_1 = arith.constant 0 : index
    %c0_2 = arith.constant 0 : index
    %2 = vector.load %arg2[%c0_1, %c0_2] : memref<400x256xbf16, #tpu.memory_space<vmem>>, vector<400x256xbf16>
    %cst = arith.constant dense<0.000000e+00> : vector<8x256xf32>
    %3 = tpu.matmul %1, %2, %cst {dimension_numbers = #tpu.dot_dimension_numbers<[1], [0], [0], [1], [0, 0, 1, 1], [], []>} : vector<8x400xbf16>, vector<400x256xbf16>, vector<8x256xf32> -> vector<8x256xf32>
    %c0_3 = arith.constant 0 : index
    %c0_4 = arith.constant 0 : index
    %4 = vector.load %arg3[%c0_3, %c0_4] : memref<1x256xf32, #tpu.memory_space<vmem>>, vector<1x256xf32>
    %5 = vector.broadcast %4 : vector<1x256xf32> to vector<8x256xf32>
    %6 = arith.addf %3, %5 : vector<8x256xf32>
    %cst_5 = arith.constant 0.000000e+00 : f32
    %7 = vector.broadcast %cst_5 : f32 to vector<8x256xf32>
    %8 = arith.maximumf %6, %7 : vector<8x256xf32>
    %9 = arith.truncf %8 : vector<8x256xf32> to vector<8x256xbf16>
    %c0_6 = arith.constant 0 : index
    %c0_7 = arith.constant 0 : index
    %10 = vector.load %arg4[%c0_6, %c0_7] : memref<256x128xbf16, #tpu.memory_space<vmem>>, vector<256x128xbf16>
    %cst_8 = arith.constant dense<0.000000e+00> : vector<8x128xf32>
    %11 = tpu.matmul %9, %10, %cst_8 {dimension_numbers = #tpu.dot_dimension_numbers<[1], [0], [0], [1], [0, 0, 1, 1], [], []>} : vector<8x256xbf16>, vector<256x128xbf16>, vector<8x128xf32> -> vector<8x128xf32>
    %c0_9 = arith.constant 0 : index
    %c0_10 = arith.constant 0 : index
    %12 = vector.load %arg5[%c0_9, %c0_10] : memref<1x128xf32, #tpu.memory_space<vmem>>, vector<1x128xf32>
    %13 = vector.broadcast %12 : vector<1x128xf32> to vector<8x128xf32>
    %14 = arith.addf %11, %13 : vector<8x128xf32>
    %cst_11 = arith.constant 0.000000e+00 : f32
    %15 = vector.broadcast %cst_11 : f32 to vector<8x128xf32>
    %16 = arith.subf %15, %14 : vector<8x128xf32>
    %17 = math.exp %16 : vector<8x128xf32>
    %cst_12 = arith.constant 1.000000e+00 : f32
    %18 = vector.broadcast %cst_12 : f32 to vector<8x128xf32>
    %19 = arith.addf %18, %17 : vector<8x128xf32>
    %20 = tpu.reciprocal %19 {approx = true} : vector<8x128xf32> -> vector<8x128xf32>
    %c0_13 = arith.constant 0 : index
    %c0_14 = arith.constant 0 : index
    %21 = vector.load %arg6[%c0_13, %c0_14] : memref<8x128xf32, #tpu.memory_space<vmem>>, vector<8x128xf32>
    tpu.vector_store %arg6[%c0_13, %c0_14], %20 {strides = array<i32>} : memref<8x128xf32, #tpu.memory_space<vmem>>, vector<8x128xf32>,
    return
  }
  func.func @transform_0(%arg0: i32) -> (i32, i32) {
    %c0_i32 = arith.constant 0 : i32
    %c0_i32_0 = arith.constant 0 : i32
    return %arg0, %c0_i32 : i32, i32
  }
  func.func @transform_1(%arg0: i32) -> (i32, i32) {
    %c0_i32 = arith.constant 0 : i32
    %c0_i32_0 = arith.constant 0 : i32
    %c0_i32_1 = arith.constant 0 : i32
    return %c0_i32, %c0_i32_0 : i32, i32
  }
  func.func @transform_2(%arg0: i32) -> (i32, i32) {
    %c0_i32 = arith.constant 0 : i32
    %c0_i32_0 = arith.constant 0 : i32
    %c0_i32_1 = arith.constant 0 : i32
    return %c0_i32, %c0_i32_0 : i32, i32
  }
  func.func @transform_3(%arg0: i32) -> (i32, i32) {
    %c0_i32 = arith.constant 0 : i32
    %c0_i32_0 = arith.constant 0 : i32
    %c0_i32_1 = arith.constant 0 : i32
    return %c0_i32, %c0_i32_0 : i32, i32
  }
  func.func @transform_4(%arg0: i32) -> (i32, i32) {
    %c0_i32 = arith.constant 0 : i32
    %c0_i32_0 = arith.constant 0 : i32
    %c0_i32_1 = arith.constant 0 : i32
    return %c0_i32, %c0_i32_0 : i32, i32
  }
  func.func @transform_5(%arg0: i32) -> (i32, i32) {
    %c0_i32 = arith.constant 0 : i32
    %c0_i32_0 = arith.constant 0 : i32
    return %arg0, %c0_i32 : i32, i32
  }
}

</mosaic_0001>

<llo_original>
// kernel: tpu_custom_call.1
$region0: #{tpu_custom_call.1}
  #allocation0 [shape = 'u32[]', space=smem, size = 0x4, offset = 0x4, fixed_abs, tag = 'smem constant byte address 0x4 - core index']
  #allocation1 [shape = 'u32[144,128]{1,0:T(1,128)}', space=vmem, size = 0x12000, scoped, tag = 'internal scratch']
  %s0 = inlined_call_operand.hbm [shape: f32[8,400], index: 0, kind: input, shape index: {}]
  %s1 = inlined_call_operand.hbm [shape: bf16[400,256], index: 1, kind: input, shape index: {}]
  %s2 = inlined_call_operand.vmem [shape: f32[1,256], index: 2, kind: input, shape index: {}]
  %s3 = inlined_call_operand.hbm [shape: bf16[256,128], index: 3, kind: input, shape index: {}]
  %s4 = inlined_call_operand.vmem [shape: f32[1,128], index: 4, kind: input, shape index: {}]
  %s5 = inlined_call_operand.hbm [shape: f32[8,128], index: 5, kind: output, shape index: {}]
  %s6 = sld [smem:[#allocation0]]
  $region42: #{tpu_custom_call.1} parent=0
    _
  %s8 = ssub.s32 1, %s6
  %s9 = scalar_select 0, %s8, %s6
  $region1: #{tpu_custom_call.1} parent=0
    #allocation2 [shape = 'u8[16384]{0}', space=vmem, size = 0x4000, scoped, tag = 'input window, operand 0, single buffered']
    #allocation3 [shape = 's32[1]{0}', space=sflag, size = 0x4, scoped, tag = 'scoped memory for tpu_custom_call.1']
    #allocation4 [shape = 's32[1]{0}', space=sflag, size = 0x4, scoped, tag = 'scoped memory for tpu_custom_call.1']
    #allocation5 [shape = 'u8[204800]{0}', space=vmem, size = 0x32000, scoped, tag = 'input window, operand 1, single buffered']
    #allocation6 [shape = 's32[1]{0}', space=sflag, size = 0x4, scoped, tag = 'scoped memory for tpu_custom_call.1']
    #allocation7 [shape = 'u8[65536]{0}', space=vmem, size = 0x10000, scoped, tag = 'input window, operand 3, single buffered']
    #allocation8 [shape = 'u8[4096]{0}', space=vmem, size = 0x1000, scoped, tag = 'output window, operand 0, single buffered']
    %10 = vsyncpa [#allocation3], 0
    %11 = vsyncpa [#allocation6], 0
    %12 = vsyncpa [#allocation4], 0
    // Predicated region
    $region2: #{tpu_custom_call.1} parent=1 // pred_check
      _
    $region3: #{tpu_custom_call.1} parent=1 // pred_check_branch
      %14 = sbr.rel (0) target = $region5
    $region4: #{tpu_custom_call.1} parent=1 // pred_region
      %s16 = ssub.s32 512, 512
      %17 = vsyncadd [#allocation3], %s16
      %s19 = sshll.u32 [#allocation2], 4
      %s20 = int_to_ptr.vmem [resolvable:$true] %s19
      %22 = dma.hbm_to_vmem [thread:$0]  %s0, 512, %s20, [#allocation3]
    $region5: #{tpu_custom_call.1} parent=1 // pred_fallthru
      _
    // Predicated region
    $region6: #{tpu_custom_call.1} parent=1 // pred_check
      _
    $region7: #{tpu_custom_call.1} parent=1 // pred_check_branch
      %24 = sbr.rel (0) target = $region9
    $region8: #{tpu_custom_call.1} parent=1 // pred_region
      %s26 = ssub.s32 6400, 6400
      %27 = vsyncadd [#allocation6], %s26
      %s28 = sshll.u32 [#allocation5], 4
      %s29 = int_to_ptr.vmem [resolvable:$true] %s28
      %34 = dma.hbm_to_vmem [thread:$0]  %s1, 6400, %s29, [#allocation6], 128, 128, 8
    $region9: #{tpu_custom_call.1} parent=1 // pred_fallthru
      _
    // Predicated region
    $region10: #{tpu_custom_call.1} parent=1 // pred_check
      _
    $region11: #{tpu_custom_call.1} parent=1 // pred_check_branch
      %36 = sbr.rel (0) target = $region13
    $region12: #{tpu_custom_call.1} parent=1 // pred_region
      _
    $region13: #{tpu_custom_call.1} parent=1 // pred_fallthru
      _
    // Predicated region
    $region14: #{tpu_custom_call.1} parent=1 // pred_check
      _
    $region15: #{tpu_custom_call.1} parent=1 // pred_check_branch
      %38 = sbr.rel (0) target = $region17
    $region16: #{tpu_custom_call.1} parent=1 // pred_region
      %s40 = ssub.s32 2048, 2048
      %41 = vsyncadd [#allocation6], %s40
      %s42 = sshll.u32 [#allocation7], 4
      %s43 = int_to_ptr.vmem [resolvable:$true] %s42
      %48 = dma.hbm_to_vmem [thread:$0]  %s3, 2048, %s43, [#allocation6], 64, 64, 4
    $region17: #{tpu_custom_call.1} parent=1 // pred_fallthru
      _
    // Predicated region
    $region18: #{tpu_custom_call.1} parent=1 // pred_check
      _
    $region19: #{tpu_custom_call.1} parent=1 // pred_check_branch
      %50 = sbr.rel (0) target = $region21
    $region20: #{tpu_custom_call.1} parent=1 // pred_region
      _
    $region21: #{tpu_custom_call.1} parent=1 // pred_fallthru
      _
    // Predicated region
    $region22: #{tpu_custom_call.1} parent=1 // pred_check
      _
    $region23: #{tpu_custom_call.1} parent=1 // pred_check_branch
      %52 = sbr.rel (0) target = $region25
    $region24: #{tpu_custom_call.1} parent=1 // pred_region
      %53 = dma.done [#allocation3], 512
    $region25: #{tpu_custom_call.1} parent=1 // pred_fallthru
      _
    // Predicated region
    $region26: #{tpu_custom_call.1} parent=1 // pred_check
      _
    $region27: #{tpu_custom_call.1} parent=1 // pred_check_branch
      %55 = sbr.rel (0) target = $region29
    $region28: #{tpu_custom_call.1} parent=1 // pred_region
      %56 = dma.done [#allocation6], 6400
    $region29: #{tpu_custom_call.1} parent=1 // pred_fallthru
      _
    // Predicated region
    $region30: #{tpu_custom_call.1} parent=1 // pred_check
      _
    $region31: #{tpu_custom_call.1} parent=1 // pred_check_branch
      %58 = sbr.rel (0) target = $region33
    $region32: #{tpu_custom_call.1} parent=1 // pred_region
      %59 = dma.done [#allocation6], 2048
    $region33: #{tpu_custom_call.1} parent=1 // pred_fallthru
      _
    %v61 = vld [vmem:[#allocation2] sm:$0xff]
    %v62 = vld [vmem:[#allocation2 + $0x8] sm:$0xff]
    %v63 = vld [vmem:[#allocation2 + $0x10] sm:$0xff]
    %v64 = vld [vmem:[#allocation2 + $0x18] sm:$0xff]
    %v65 = vpack.c.bf16 %v61, %v61
    %v66 = vpack.c.bf16 %v62, %v62
    %v67 = vpack.c.bf16 %v63, %v63
    %v68 = vpack.c.bf16 %v64, %v64
    %v69 = vld [vmem:[#allocation5] sm:$0xff]
    %v70 = vld [vmem:[#allocation5 + $0x8] sm:$0xff]
    %v71 = vld [vmem:[#allocation5 + $0x10] sm:$0xff]
    %v72 = vld [vmem:[#allocation5 + $0x18] sm:$0xff]
    %v73 = vld [vmem:[#allocation5 + $0x20] sm:$0xff]
    %v74 = vld [vmem:[#allocation5 + $0x28] sm:$0xff]
    %v75 = vld [vmem:[#allocation5 + $0x30] sm:$0xff]
    %v76 = vld [vmem:[#allocation5 + $0x38] sm:$0xff]
    %v77 = vld [vmem:[#allocation5 + $0x40] sm:$0xff]
    %v78 = vld [vmem:[#allocation5 + $0x48] sm:$0xff]
    %v79 = vld [vmem:[#allocation5 + $0x50] sm:$0xff]
    %v80 = vld [vmem:[#allocation5 + $0x58] sm:$0xff]
    %v81 = vld [vmem:[#allocation5 + $0x60] sm:$0xff]
    %v82 = vld [vmem:[#allocation5 + $0x68] sm:$0xff]
    %v83 = vld [vmem:[#allocation5 + $0x70] sm:$0xff]
    %v84 = vld [vmem:[#allocation5 + $0x78] sm:$0xff]
    %v85 = vld [vmem:[#allocation5 + $0x80] sm:$0xff]
    %v86 = vld [vmem:[#allocation5 + $0x88] sm:$0xff]
    %v87 = vld [vmem:[#allocation5 + $0x90] sm:$0xff]
    %v88 = vld [vmem:[#allocation5 + $0x98] sm:$0xff]
    %v89 = vld [vmem:[#allocation5 + $0xa0] sm:$0xff]
    %v90 = vld [vmem:[#allocation5 + $0xa8] sm:$0xff]
    %v91 = vld [vmem:[#allocation5 + $0xb0] sm:$0xff]
    %v92 = vld [vmem:[#allocation5 + $0xb8] sm:$0xff]
    %v93 = vld [vmem:[#allocation5 + $0xc0] sm:$0xff]
    %v94 = vld [vmem:[#allocation5 + $0xc8] sm:$0xff]
    %v95 = vld [vmem:[#allocation5 + $0xd0] sm:$0xff]
    %v96 = vld [vmem:[#allocation5 + $0xd8] sm:$0xff]
    %v97 = vld [vmem:[#allocation5 + $0xe0] sm:$0xff]
    %v98 = vld [vmem:[#allocation5 + $0xe8] sm:$0xff]
    %v99 = vld [vmem:[#allocation5 + $0xf0] sm:$0xff]
    %v100 = vld [vmem:[#allocation5 + $0xf8] sm:$0xff]
    %v101 = vld [vmem:[#allocation5 + $0x100] sm:$0xff]
    %v102 = vld [vmem:[#allocation5 + $0x108] sm:$0xff]
    %v103 = vld [vmem:[#allocation5 + $0x110] sm:$0xff]
    %v104 = vld [vmem:[#allocation5 + $0x118] sm:$0xff]
    %v105 = vld [vmem:[#allocation5 + $0x120] sm:$0xff]
    %v106 = vld [vmem:[#allocation5 + $0x128] sm:$0xff]
    %v107 = vld [vmem:[#allocation5 + $0x130] sm:$0xff]
    %v108 = vld [vmem:[#allocation5 + $0x138] sm:$0xff]
    %v109 = vld [vmem:[#allocation5 + $0x140] sm:$0xff]
    %v110 = vld [vmem:[#allocation5 + $0x148] sm:$0xff]
    %v111 = vld [vmem:[#allocation5 + $0x150] sm:$0xff]
    %v112 = vld [vmem:[#allocation5 + $0x158] sm:$0xff]
    %v113 = vld [vmem:[#allocation5 + $0x160] sm:$0xff]
    %v114 = vld [vmem:[#allocation5 + $0x168] sm:$0xff]
    %v115 = vld [vmem:[#allocation5 + $0x170] sm:$0xff]
    %v116 = vld [vmem:[#allocation5 + $0x178] sm:$0xff]
    %v117 = vld [vmem:[#allocation5 + $0x180] sm:$0xff]
    %v118 = vld [vmem:[#allocation5 + $0x188] sm:$0xff]
    %v119 = vld [vmem:[%s2] sm:$0x3]
    %v121 = vlaneseq
    %v122 = vshrl.u32 %v121, 7
    %v123 = vsub.s32 0, %v122
    %v124 = vrot.slane %v119, %v123
    %v125 = vlaneseq
    %v126 = vshrl.u32 %v125, 7
    %v127 = vsub.s32 1, %v126
    %v128 = vrot.slane %v119, %v127
    %v181 = vunpack.c.l.b16 %v69
    %v182 = vunpack.c.h.b16 %v69
    %v183 = vunpack.c.l.b16 %v70
    %v184 = vunpack.c.h.b16 %v70
    %v185 = vunpack.c.l.b16 %v71
    %v186 = vunpack.c.h.b16 %v71
    %v187 = vunpack.c.l.b16 %v72
    %v188 = vunpack.c.h.b16 %v72
    %v189 = vunpack.c.l.b16 %v73
    %v190 = vunpack.c.h.b16 %v73
    %v191 = vunpack.c.l.b16 %v74
    %v192 = vunpack.c.h.b16 %v74
    %v193 = vunpack.c.l.b16 %v75
    %v194 = vunpack.c.h.b16 %v75
    %v195 = vunpack.c.l.b16 %v76
    %v196 = vunpack.c.h.b16 %v76
    %v197 = vunpack.c.l.b16 %v77
    %v198 = vunpack.c.h.b16 %v77
    %v199 = vunpack.c.l.b16 %v78
    %v200 = vunpack.c.h.b16 %v78
    %v201 = vunpack.c.l.b16 %v79
    %v202 = vunpack.c.h.b16 %v79
    %v203 = vunpack.c.l.b16 %v80
    %v204 = vunpack.c.h.b16 %v80
    %v205 = vunpack.c.l.b16 %v81
    %v206 = vunpack.c.h.b16 %v81
    %v207 = vunpack.c.l.b16 %v82
    %v208 = vunpack.c.h.b16 %v82
    %v209 = vunpack.c.l.b16 %v83
    %v210 = vunpack.c.h.b16 %v83
    %v211 = vunpack.c.l.b16 %v84
    %v212 = vunpack.c.h.b16 %v84
    %v213 = vunpack.c.l.b16 %v85
    %v214 = vunpack.c.h.b16 %v85
    %v215 = vunpack.c.l.b16 %v86
    %v216 = vunpack.c.h.b16 %v86
    %v217 = vunpack.c.l.b16 %v87
    %v218 = vunpack.c.h.b16 %v87
    %v219 = vunpack.c.l.b16 %v88
    %v220 = vunpack.c.h.b16 %v88
    %v221 = vunpack.c.l.b16 %v89
    %v222 = vunpack.c.h.b16 %v89
    %v223 = vunpack.c.l.b16 %v90
    %v224 = vunpack.c.h.b16 %v90
    %v225 = vunpack.c.l.b16 %v91
    %v226 = vunpack.c.h.b16 %v91
    %v227 = vunpack.c.l.b16 %v92
    %v228 = vunpack.c.h.b16 %v92
    %v229 = vunpack.c.l.b16 %v93
    %v230 = vunpack.c.h.b16 %v93
    %v231 = vunpack.c.l.b16 %v94
    %v232 = vunpack.c.h.b16 %v94
    %v233 = vunpack.c.l.b16 %v95
    %v234 = vunpack.c.h.b16 %v95
    %v235 = vunpack.c.l.b16 %v96
    %v236 = vunpack.c.h.b16 %v96
    %v237 = vunpack.c.l.b16 %v97
    %v238 = vunpack.c.h.b16 %v97
    %v239 = vunpack.c.l.b16 %v98
    %v240 = vunpack.c.h.b16 %v98
    %v241 = vunpack.c.l.b16 %v99
    %v242 = vunpack.c.h.b16 %v99
    %v243 = vunpack.c.l.b16 %v100
    %v244 = vunpack.c.h.b16 %v100
    %v245 = vunpack.c.l.b16 %v101
    %v246 = vunpack.c.h.b16 %v101
    %v247 = vunpack.c.l.b16 %v102
    %v248 = vunpack.c.h.b16 %v102
    %v249 = vunpack.c.l.b16 %v103
    %v250 = vunpack.c.h.b16 %v103
    %v251 = vunpack.c.l.b16 %v104
    %v252 = vunpack.c.h.b16 %v104
    %v253 = vunpack.c.l.b16 %v105
    %v254 = vunpack.c.h.b16 %v105
    %v255 = vunpack.c.l.b16 %v106
    %v256 = vunpack.c.h.b16 %v106
    %v257 = vunpack.c.l.b16 %v107
    %v258 = vunpack.c.h.b16 %v107
    %v259 = vunpack.c.l.b16 %v108
    %v260 = vunpack.c.h.b16 %v108
    %v261 = vunpack.c.l.b16 %v109
    %v262 = vunpack.c.h.b16 %v109
    %v263 = vunpack.c.l.b16 %v110
    %v264 = vunpack.c.h.b16 %v110
    %v265 = vunpack.c.l.b16 %v111
    %v266 = vunpack.c.h.b16 %v111
    %v267 = vunpack.c.l.b16 %v112
    %v268 = vunpack.c.h.b16 %v112
    %v269 = vunpack.c.l.b16 %v113
    %v270 = vunpack.c.h.b16 %v113
    %v271 = vunpack.c.l.b16 %v114
    %v272 = vunpack.c.h.b16 %v114
    %v273 = vunpack.c.l.b16 %v115
    %v274 = vunpack.c.h.b16 %v115
    %v275 = vunpack.c.l.b16 %v116
    %v276 = vunpack.c.h.b16 %v116
    %v277 = vunpack.c.l.b16 %v117
    %v278 = vunpack.c.h.b16 %v117
    %v279 = vunpack.c.l.b16 %v118
    %v280 = vunpack.c.h.b16 %v118
    %v281 = vpack.c.b16 %v183, %v181
    %v282 = vpack.c.b16 %v184, %v182
    %v283 = vpack.c.b16 %v187, %v185
    %v284 = vpack.c.b16 %v188, %v186
    %v285 = vpack.c.b16 %v191, %v189
    %v286 = vpack.c.b16 %v192, %v190
    %v287 = vpack.c.b16 %v195, %v193
    %v288 = vpack.c.b16 %v196, %v194
    %v289 = vpack.c.b16 %v199, %v197
    %v290 = vpack.c.b16 %v200, %v198
    %v291 = vpack.c.b16 %v203, %v201
    %v292 = vpack.c.b16 %v204, %v202
    %v293 = vpack.c.b16 %v207, %v205
    %v294 = vpack.c.b16 %v208, %v206
    %v295 = vpack.c.b16 %v211, %v209
    %v296 = vpack.c.b16 %v212, %v210
    %v297 = vpack.c.b16 %v215, %v213
    %v298 = vpack.c.b16 %v216, %v214
    %v299 = vpack.c.b16 %v219, %v217
    %v300 = vpack.c.b16 %v220, %v218
    %v301 = vpack.c.b16 %v223, %v221
    %v302 = vpack.c.b16 %v224, %v222
    %v303 = vpack.c.b16 %v227, %v225
    %v304 = vpack.c.b16 %v228, %v226
    %v305 = vpack.c.b16 %v231, %v229
    %v306 = vpack.c.b16 %v232, %v230
    %v307 = vpack.c.b16 %v235, %v233
    %v308 = vpack.c.b16 %v236, %v234
    %v309 = vpack.c.b16 %v239, %v237
    %v310 = vpack.c.b16 %v240, %v238
    %v311 = vpack.c.b16 %v243, %v241
    %v312 = vpack.c.b16 %v244, %v242
    %v313 = vpack.c.b16 %v247, %v245
    %v314 = vpack.c.b16 %v248, %v246
    %v315 = vpack.c.b16 %v251, %v249
    %v316 = vpack.c.b16 %v252, %v250
    %v317 = vpack.c.b16 %v255, %v253
    %v318 = vpack.c.b16 %v256, %v254
    %v319 = vpack.c.b16 %v259, %v257
    %v320 = vpack.c.b16 %v260, %v258
    %v321 = vpack.c.b16 %v263, %v261
    %v322 = vpack.c.b16 %v264, %v262
    %v323 = vpack.c.b16 %v267, %v265
    %v324 = vpack.c.b16 %v268, %v266
    %v325 = vpack.c.b16 %v271, %v269
    %v326 = vpack.c.b16 %v272, %v270
    %v327 = vpack.c.b16 %v275, %v273
    %v328 = vpack.c.b16 %v276, %v274
    %v329 = vpack.c.b16 %v279, %v277
    %v330 = vpack.c.b16 %v280, %v278
    %vm381 = vcmask 130048
    %v383 = vsel %vm381, %v68, 0
    %385 = vmatprep.subr.bf16.mxu0 %v282
    %386 = vmatpush1.bf16.msra.mxu0 %v281
    %387 = vmatprep.subr.bf16.mxu0 %v284
    %388 = vmatpush1.bf16.msra.mxu0 %v283
    %389 = vmatprep.subr.bf16.mxu0 %v286
    %390 = vmatpush1.bf16.msra.mxu0 %v285
    %391 = vmatprep.subr.bf16.mxu0 %v288
    %392 = vmatpush1.bf16.msra.mxu0 %v287
    %393 = vmatprep.subr.bf16.mxu0 %v290
    %394 = vmatpush1.bf16.msra.mxu0 %v289
    %395 = vmatprep.subr.bf16.mxu0 %v292
    %396 = vmatpush1.bf16.msra.mxu0 %v291
    %397 = vmatprep.subr.bf16.mxu0 %v294
    %398 = vmatpush1.bf16.msra.mxu0 %v293
    %399 = vmatprep.subr.bf16.mxu0 %v296
    %400 = vmatpush1.bf16.msra.mxu0 %v295
    %401 = vmatprep.subr.bf16.mxu0 %v298
    %402 = vmatpush1.bf16.msra.mxu0 %v297
    %403 = vmatprep.subr.bf16.mxu0 %v300
    %404 = vmatpush1.bf16.msra.mxu0 %v299
    %405 = vmatprep.subr.bf16.mxu0 %v302
    %406 = vmatpush1.bf16.msra.mxu0 %v301
    %407 = vmatprep.subr.bf16.mxu0 %v304
    %408 = vmatpush1.bf16.msra.mxu0 %v303
    %409 = vmatprep.subr.bf16.mxu0 %v306
    %410 = vmatpush1.bf16.msra.mxu0 %v305
    %411 = vmatprep.subr.bf16.mxu0 %v308
    %412 = vmatpush1.bf16.msra.mxu0 %v307
    %413 = vmatprep.subr.bf16.mxu0 %v310
    %414 = vmatpush1.bf16.msra.mxu0 %v309
    %415 = vmatprep.subr.bf16.mxu0 %v312
    %416 = vmatpush1.bf16.msra.mxu0 %v311
    %417 = vmatprep.mubr.bf16.mxu0 %v66
    %418 = vmatmul.mubr.bf16.gmra.mrb[0].mxu0 %v65
    %v419 = vpop.f32.mrb[0].mxu0
    %v420 = vadd.f32 %v124, %v419
    %v421 = vpop.f32.mrb[0].mxu0
    %v422 = vadd.f32 %v128, %v421
    %v423 = vpop.f32.mrb[0].mxu0
    %v424 = vpop.f32.mrb[0].mxu0
    %425 = vdwg.mxu0
    %426 = vmatprep.subr.bf16.mxu0 %v314
    %427 = vmatpush1.bf16.msra.mxu0 %v313
    %428 = vmatprep.subr.bf16.mxu0 %v316
    %429 = vmatpush1.bf16.msra.mxu0 %v315
    %430 = vmatprep.subr.bf16.mxu0 %v318
    %431 = vmatpush1.bf16.msra.mxu0 %v317
    %432 = vmatprep.subr.bf16.mxu0 %v320
    %433 = vmatpush1.bf16.msra.mxu0 %v319
    %434 = vmatprep.subr.bf16.mxu0 %v322
    %435 = vmatpush1.bf16.msra.mxu0 %v321
    %436 = vmatprep.subr.bf16.mxu0 %v324
    %437 = vmatpush1.bf16.msra.mxu0 %v323
    %438 = vmatprep.subr.bf16.mxu0 %v326
    %439 = vmatpush1.bf16.msra.mxu0 %v325
    %440 = vmatprep.subr.bf16.mxu0 %v328
    %441 = vmatpush1.bf16.msra.mxu0 %v327
    %442 = vmatprep.subr.bf16.mxu0 %v330
    %443 = vmatpush1.bf16.msra.mxu0 %v329
    %444 = vmatprep.subr.bf16.mxu0 0
    %445 = vmatpush1.bf16.msra.mxu0 0
    %446 = vmatprep.subr.bf16.mxu0 0
    %447 = vmatpush1.bf16.msra.mxu0 0
    %448 = vmatprep.subr.bf16.mxu0 0
    %449 = vmatpush1.bf16.msra.mxu0 0
    %450 = vmatprep.subr.bf16.mxu0 0
    %451 = vmatpush1.bf16.msra.mxu0 0
    %452 = vmatprep.subr.bf16.mxu0 0
    %453 = vmatpush1.bf16.msra.mxu0 0
    %454 = vmatprep.subr.bf16.mxu0 0
    %455 = vmatpush1.bf16.msra.mxu0 0
    %456 = vmatprep.subr.bf16.mxu0 0
    %457 = vmatpush1.bf16.msra.mxu0 0
    %458 = vmatprep.mubr.bf16.mxu0 %v383
    %459 = vmatmul.mubr.bf16.gmra.mrb[0].mxu0 %v67
    %v460 = vpop.f32.mrb[0].mxu0
    %v461 = vadd.f32 %v420, %v460
    %v462 = vpop.f32.mrb[0].mxu0
    %v463 = vadd.f32 %v422, %v462
    %v464 = vpop.f32.mrb[0].mxu0
    %v465 = vpop.f32.mrb[0].mxu0
    %466 = vdwg.mxu0
    %v467 = vmax.f32 %v461, 0.0
    %v468 = vmax.f32 %v463, 0.0
    %v469 = vpack.c.bf16 %v467, %v467
    %v470 = vpack.c.bf16 %v468, %v468
    %v471 = vld [vmem:[#allocation7] sm:$0xf]
    %v472 = vld [vmem:[#allocation7 + $0x4] sm:$0xf]
    %v473 = vld [vmem:[#allocation7 + $0x8] sm:$0xf]
    %v474 = vld [vmem:[#allocation7 + $0xc] sm:$0xf]
    %v475 = vld [vmem:[#allocation7 + $0x10] sm:$0xf]
    %v476 = vld [vmem:[#allocation7 + $0x14] sm:$0xf]
    %v477 = vld [vmem:[#allocation7 + $0x18] sm:$0xf]
    %v478 = vld [vmem:[#allocation7 + $0x1c] sm:$0xf]
    %v479 = vld [vmem:[#allocation7 + $0x20] sm:$0xf]
    %v480 = vld [vmem:[#allocation7 + $0x24] sm:$0xf]
    %v481 = vld [vmem:[#allocation7 + $0x28] sm:$0xf]
    %v482 = vld [vmem:[#allocation7 + $0x2c] sm:$0xf]
    %v483 = vld [vmem:[#allocation7 + $0x30] sm:$0xf]
    %v484 = vld [vmem:[#allocation7 + $0x34] sm:$0xf]
    %v485 = vld [vmem:[#allocation7 + $0x38] sm:$0xf]
    %v486 = vld [vmem:[#allocation7 + $0x3c] sm:$0xf]
    %v487 = vld [vmem:[#allocation7 + $0x40] sm:$0xf]
    %v488 = vld [vmem:[#allocation7 + $0x44] sm:$0xf]
    %v489 = vld [vmem:[#allocation7 + $0x48] sm:$0xf]
    %v490 = vld [vmem:[#allocation7 + $0x4c] sm:$0xf]
    %v491 = vld [vmem:[#allocation7 + $0x50] sm:$0xf]
    %v492 = vld [vmem:[#allocation7 + $0x54] sm:$0xf]
    %v493 = vld [vmem:[#allocation7 + $0x58] sm:$0xf]
    %v494 = vld [vmem:[#allocation7 + $0x5c] sm:$0xf]
    %v495 = vld [vmem:[#allocation7 + $0x60] sm:$0xf]
    %v496 = vld [vmem:[#allocation7 + $0x64] sm:$0xf]
    %v497 = vld [vmem:[#allocation7 + $0x68] sm:$0xf]
    %v498 = vld [vmem:[#allocation7 + $0x6c] sm:$0xf]
    %v499 = vld [vmem:[#allocation7 + $0x70] sm:$0xf]
    %v500 = vld [vmem:[#allocation7 + $0x74] sm:$0xf]
    %v501 = vld [vmem:[#allocation7 + $0x78] sm:$0xf]
    %v502 = vld [vmem:[#allocation7 + $0x7c] sm:$0xf]
    %v503 = vld [vmem:[%s4] sm:$0x1]
    %v505 = vlaneseq
    %v506 = vshrl.u32 %v505, 7
    %v507 = vsub.s32 0, %v506
    %v508 = vrot.slane %v503, %v507
    %v542 = vunpack.c.l.b16 %v471
    %v543 = vunpack.c.l.b16 %v472
    %v544 = vunpack.c.l.b16 %v473
    %v545 = vunpack.c.l.b16 %v474
    %v546 = vunpack.c.l.b16 %v475
    %v547 = vunpack.c.l.b16 %v476
    %v548 = vunpack.c.l.b16 %v477
    %v549 = vunpack.c.l.b16 %v478
    %v550 = vunpack.c.l.b16 %v479
    %v551 = vunpack.c.l.b16 %v480
    %v552 = vunpack.c.l.b16 %v481
    %v553 = vunpack.c.l.b16 %v482
    %v554 = vunpack.c.l.b16 %v483
    %v555 = vunpack.c.l.b16 %v484
    %v556 = vunpack.c.l.b16 %v485
    %v557 = vunpack.c.l.b16 %v486
    %v558 = vunpack.c.l.b16 %v487
    %v559 = vunpack.c.l.b16 %v488
    %v560 = vunpack.c.l.b16 %v489
    %v561 = vunpack.c.l.b16 %v490
    %v562 = vunpack.c.l.b16 %v491
    %v563 = vunpack.c.l.b16 %v492
    %v564 = vunpack.c.l.b16 %v493
    %v565 = vunpack.c.l.b16 %v494
    %v566 = vunpack.c.l.b16 %v495
    %v567 = vunpack.c.l.b16 %v496
    %v568 = vunpack.c.l.b16 %v497
    %v569 = vunpack.c.l.b16 %v498
    %v570 = vunpack.c.l.b16 %v499
    %v571 = vunpack.c.l.b16 %v500
    %v572 = vunpack.c.l.b16 %v501
    %v573 = vunpack.c.l.b16 %v502
    %v574 = vpack.c.b16 %v543, %v542
    %v575 = vpack.c.b16 %v545, %v544
    %v576 = vpack.c.b16 %v547, %v546
    %v577 = vpack.c.b16 %v549, %v548
    %v578 = vpack.c.b16 %v551, %v550
    %v579 = vpack.c.b16 %v553, %v552
    %v580 = vpack.c.b16 %v555, %v554
    %v581 = vpack.c.b16 %v557, %v556
    %v582 = vpack.c.b16 %v559, %v558
    %v583 = vpack.c.b16 %v561, %v560
    %v584 = vpack.c.b16 %v563, %v562
    %v585 = vpack.c.b16 %v565, %v564
    %v586 = vpack.c.b16 %v567, %v566
    %v587 = vpack.c.b16 %v569, %v568
    %v588 = vpack.c.b16 %v571, %v570
    %v589 = vpack.c.b16 %v573, %v572
    %606 = vmatprep.subr.bf16.mxu0 0
    %607 = vmatpush1.bf16.msra.mxu0 %v574
    %608 = vmatprep.subr.bf16.mxu0 0
    %609 = vmatpush1.bf16.msra.mxu0 %v575
    %610 = vmatprep.subr.bf16.mxu0 0
    %611 = vmatpush1.bf16.msra.mxu0 %v576
    %612 = vmatprep.subr.bf16.mxu0 0
    %613 = vmatpush1.bf16.msra.mxu0 %v577
    %614 = vmatprep.subr.bf16.mxu0 0
    %615 = vmatpush1.bf16.msra.mxu0 %v578
    %616 = vmatprep.subr.bf16.mxu0 0
    %617 = vmatpush1.bf16.msra.mxu0 %v579
    %618 = vmatprep.subr.bf16.mxu0 0
    %619 = vmatpush1.bf16.msra.mxu0 %v580
    %620 = vmatprep.subr.bf16.mxu0 0
    %621 = vmatpush1.bf16.msra.mxu0 %v581
    %622 = vmatprep.subr.bf16.mxu0 0
    %623 = vmatpush1.bf16.msra.mxu0 %v582
    %624 = vmatprep.subr.bf16.mxu0 0
    %625 = vmatpush1.bf16.msra.mxu0 %v583
    %626 = vmatprep.subr.bf16.mxu0 0
    %627 = vmatpush1.bf16.msra.mxu0 %v584
    %628 = vmatprep.subr.bf16.mxu0 0
    %629 = vmatpush1.bf16.msra.mxu0 %v585
    %630 = vmatprep.subr.bf16.mxu0 0
    %631 = vmatpush1.bf16.msra.mxu0 %v586
    %632 = vmatprep.subr.bf16.mxu0 0
    %633 = vmatpush1.bf16.msra.mxu0 %v587
    %634 = vmatprep.subr.bf16.mxu0 0
    %635 = vmatpush1.bf16.msra.mxu0 %v588
    %636 = vmatprep.subr.bf16.mxu0 0
    %637 = vmatpush1.bf16.msra.mxu0 %v589
    %638 = vmatprep.mubr.bf16.mxu0 %v470
    %639 = vmatmul.mubr.bf16.gmra.mrb[0].mxu0 %v469
    %v640 = vpop.f32.mrb[0].mxu0
    %v641 = vadd.f32 %v508, %v640
    %v642 = vpop.f32.mrb[0].mxu0
    %v643 = vpop.f32.mrb[0].mxu0
    %v644 = vpop.f32.mrb[0].mxu0
    %645 = vdwg.mxu0
    %v646 = vsub.f32 0.0, %v641
    %v647 = vmul.f32 %v646, 1.442695
    %v648 = vpow.pop %v647
    %v649 = vadd.f32 %v648, 1.0
    %v650 = vrcp.pop %v649
    %651 = vst [vmem:[#allocation8] sm:$0xff] %v650
    // Predicated region
    $region34: #{tpu_custom_call.1} parent=1 // pred_check
      _
    $region35: #{tpu_custom_call.1} parent=1 // pred_check_branch
      %653 = sbr.rel (0) target = $region37
    $region36: #{tpu_custom_call.1} parent=1 // pred_region
      %s655 = ssub.s32 128, 128
      %656 = vsyncadd [#allocation4], %s655
      %s658 = sshll.u32 [#allocation8], 4
      %s659 = int_to_ptr.vmem [resolvable:$true] %s658
      %661 = dma.vmem_to_hbm [thread:$0]  %s659, 128, %s5, [#allocation4]
    $region37: #{tpu_custom_call.1} parent=1 // pred_fallthru
      _
    // Predicated region
    $region38: #{tpu_custom_call.1} parent=1 // pred_check
      _
    $region39: #{tpu_custom_call.1} parent=1 // pred_check_branch
      %663 = sbr.rel (0) target = $region41
    $region40: #{tpu_custom_call.1} parent=1 // pred_region
      %664 = dma.done [#allocation4], 128
    $region41: #{tpu_custom_call.1} parent=1 // pred_fallthru
      _
    %665 = vsyncpa [#allocation3], 1
    %666 = vsyncpa [#allocation6], 1
    %667 = vsyncpa [#allocation4], 1

</llo_original>
